<compile_context>
chip_gen: v5e
topology: v5e:2x2
jax: 0.10.0
libtpu: 0.0.40
codegen_flags: <defaults>
</compile_context>

<pallas_src>
import jax
import jax.numpy as jnp
from jax.experimental import pallas as pl
from jax.experimental.pallas import tpu as pltpu


def _square_kernel(x_ref, o_ref):
    x = x_ref[...]
    o_ref[...] = x * x


def _run_2d(x2d, tile_rows, cols):
    rows = x2d.shape[0]
    grid = (rows // tile_rows,)
    return pl.pallas_call(
        _square_kernel,
        out_shape=jax.ShapeDtypeStruct((rows, cols), x2d.dtype),
        grid=grid,
        in_specs=[pl.BlockSpec((tile_rows, cols), lambda i: (i, 0))],
        out_specs=pl.BlockSpec((tile_rows, cols), lambda i: (i, 0)),
        compiler_params=pltpu.CompilerParams(
            dimension_semantics=("parallel",)
        ),
    )(x2d)


def _pick_cols(n):
    """Largest lane-dense column width (multiple of 128) that divides n."""
    for c in (2048, 1024, 512, 256, 128):
        if n % c == 0:
            return c
    return None


def _pick_tile_rows(rows, cols, itemsize, max_block_bytes):
    """tile_rows dividing `rows`, multiple of 8 (or == rows), block <= cap."""
    max_rows = max(8, max_block_bytes // (cols * itemsize))
    if rows <= max_rows:
        return rows  # single-block rows => block equals full array dims
    t = (max_rows // 8) * 8
    while t >= 8:
        if rows % t == 0:
            return t
        t -= 8
    return None


def square(x, *, max_block_bytes=2 * 1024 * 1024):
    """Elementwise x*x over an arbitrary-shaped array (NCHW expected)."""
    orig_shape = x.shape
    dtype = x.dtype
    n = x.size
    itemsize = jnp.dtype(dtype).itemsize

    # ---- Fast path: no padding, no tail slice (zero extra HBM passes). ----
    cols = _pick_cols(n)
    if cols is not None:
        rows = n // cols
        tile_rows = _pick_tile_rows(rows, cols, itemsize, max_block_bytes)
        if tile_rows is not None:
            x2d = x.reshape(rows, cols)
            out2d = _run_2d(x2d, tile_rows, cols)
            return out2d.reshape(orig_shape)

    # ---- General (ragged) path: pad only the row remainder. ----
    # square(0) == 0, and the padded tail is sliced off, so padding is safe.
    cols = 512
    rows = pl.cdiv(n, cols)
    tile_rows = min(1024, ((rows + 7) // 8) * 8)  # multiple of 8, <= 2 MiB/blk
    rows_padded = pl.cdiv(rows, tile_rows) * tile_rows
    padded_n = rows_padded * cols

    x_flat = jnp.ravel(x)
    x_flat = jnp.pad(x_flat, (0, padded_n - n))
    x2d = x_flat.reshape(rows_padded, cols)

    out2d = _run_2d(x2d, tile_rows, cols)
    return out2d.reshape(-1)[:n].reshape(orig_shape)


if __name__ == "__main__":
    key = jax.random.PRNGKey(0)

    # Small NCHW input consistent with the conv-net usage of SquareLayer.
    x = jax.random.normal(key, (2, 4, 16, 16), dtype=jnp.float32)
    y = square(x)
    jax.block_until_ready(y)
    y_ref = x * x
    assert y.shape == x.shape and y.dtype == x.dtype
    assert jnp.allclose(y, y_ref, atol=1e-6, rtol=1e-6)

    # Also exercise the ragged (padded) path with a non-128-divisible size.
    x2 = jax.random.normal(jax.random.PRNGKey(0), (3, 5, 7), dtype=jnp.float32)
    y2 = square(x2)
    jax.block_until_ready(y2)
    assert jnp.allclose(y2, x2 * x2, atol=1e-6, rtol=1e-6)

    print("KERNEL_OK")
</pallas_src>

<mosaic_0001>
module attributes {stable_mosaic.version = 11 : i64} {
  func.func @_square_kernel(%arg0: i32, %arg1: memref<1x2048xf32, #tpu.memory_space<vmem>>, %arg2: memref<1x2048xf32, #tpu.memory_space<vmem>>) attributes {dimension_semantics = [#tpu.dimension_semantics<parallel>], iteration_bounds = array<i64: 1>, scalar_prefetch = 0 : i64, scratch_operands = 0 : i64, tpu.core_type = #tpu.core_type<tc>, window_params = [{transform_indices = @transform_0, window_bounds = array<i64: 1, 2048>}, {transform_indices = @transform_1, window_bounds = array<i64: 1, 2048>}]} {
    %c0 = arith.constant 0 : index
    %c0_0 = arith.constant 0 : index
    %0 = vector.load %arg1[%c0, %c0_0] : memref<1x2048xf32, #tpu.memory_space<vmem>>, vector<1x2048xf32>
    %1 = arith.mulf %0, %0 : vector<1x2048xf32>
    %c0_1 = arith.constant 0 : index
    %c0_2 = arith.constant 0 : index
    %2 = vector.load %arg2[%c0_1, %c0_2] : memref<1x2048xf32, #tpu.memory_space<vmem>>, vector<1x2048xf32>
    tpu.vector_store %arg2[%c0_1, %c0_2], %1 {strides = array<i32>} : memref<1x2048xf32, #tpu.memory_space<vmem>>, vector<1x2048xf32>,
    return
  }
  func.func @transform_0(%arg0: i32) -> (i32, i32) {
    %c0_i32 = arith.constant 0 : i32
    %c0_i32_0 = arith.constant 0 : i32
    return %arg0, %c0_i32 : i32, i32
  }
  func.func @transform_1(%arg0: i32) -> (i32, i32) {
    %c0_i32 = arith.constant 0 : i32
    %c0_i32_0 = arith.constant 0 : i32
    return %arg0, %c0_i32 : i32, i32
  }
}

</mosaic_0001>

<llo_original>
// kernel: tpu_custom_call.1
$region0: #{tpu_custom_call.1}
  #allocation0 [shape = 'u32[]', space=smem, size = 0x4, offset = 0x4, fixed_abs, tag = 'smem constant byte address 0x4 - core index']
  #allocation1 [shape = 'u32[72,128]{1,0:T(1,128)}', space=vmem, size = 0x9000, scoped, tag = 'internal scratch']
  %s0 = inlined_call_operand.hbm [shape: f32[1,2048], index: 0, kind: input, shape index: {}]
  %s1 = inlined_call_operand.hbm [shape: f32[1,2048], index: 1, kind: output, shape index: {}]
  %s2 = sld [smem:[#allocation0]]
  $region18: #{tpu_custom_call.1} parent=0
    _
  %s4 = ssub.s32 1, %s2
  %s5 = scalar_select 0, %s4, %s2
  $region1: #{tpu_custom_call.1} parent=0
    #allocation2 [shape = 'u8[8192]{0}', space=vmem, size = 0x2000, scoped, tag = 'input window, operand 0, single buffered']
    #allocation3 [shape = 's32[1]{0}', space=sflag, size = 0x4, scoped, tag = 'scoped memory for tpu_custom_call.1']
    #allocation4 [shape = 's32[1]{0}', space=sflag, size = 0x4, scoped, tag = 'scoped memory for tpu_custom_call.1']
    #allocation5 [shape = 'u8[8192]{0}', space=vmem, size = 0x2000, scoped, tag = 'output window, operand 0, single buffered']
    %6 = vsyncpa [#allocation3], 0
    %7 = vsyncpa [#allocation4], 0
    // Predicated region
    $region2: #{tpu_custom_call.1} parent=1 // pred_check
      _
    $region3: #{tpu_custom_call.1} parent=1 // pred_check_branch
      %9 = sbr.rel (0) target = $region5
    $region4: #{tpu_custom_call.1} parent=1 // pred_region
      %11 = vsyncadd [#allocation3], 0
      %s13 = sshll.u32 %s0, 4
      %s14 = int_to_ptr.hbm [resolvable:$true] %s13
      %s15 = sshll.u32 [#allocation2], 4
      %s16 = int_to_ptr.vmem [resolvable:$true] %s15
      %18 = dma.hbm_to_vmem [thread:$0]  %s14, 256, %s16, [#allocation3]
    $region5: #{tpu_custom_call.1} parent=1 // pred_fallthru
      _
    // Predicated region
    $region6: #{tpu_custom_call.1} parent=1 // pred_check
      _
    $region7: #{tpu_custom_call.1} parent=1 // pred_check_branch
      %20 = sbr.rel (0) target = $region9
    $region8: #{tpu_custom_call.1} parent=1 // pred_region
      %22 = dma.done [#allocation3], 256
    $region9: #{tpu_custom_call.1} parent=1 // pred_fallthru
      _
    %v23 = vld [vmem:[#allocation2] sm:$0xff]
    %v24 = vld [vmem:[#allocation2 + $0x8] sm:$0xff]
    %v25 = vmul.f32 %v23, %v23
    %v26 = vmul.f32 %v24, %v24
    %27 = vst [vmem:[#allocation5] sm:$0xff] %v25
    %28 = vst [vmem:[#allocation5 + $0x8] sm:$0xff] %v26
    // Predicated region
    $region10: #{tpu_custom_call.1} parent=1 // pred_check
      _
    $region11: #{tpu_custom_call.1} parent=1 // pred_check_branch
      %30 = sbr.rel (0) target = $region13
    $region12: #{tpu_custom_call.1} parent=1 // pred_region
      %32 = vsyncadd [#allocation4], 0
      %s34 = sshll.u32 [#allocation5], 4
      %s35 = int_to_ptr.vmem [resolvable:$true] %s34
      %s36 = sshll.u32 %s1, 4
      %s37 = int_to_ptr.hbm [resolvable:$true] %s36
      %39 = dma.vmem_to_hbm [thread:$0]  %s35, 256, %s37, [#allocation4]
    $region13: #{tpu_custom_call.1} parent=1 // pred_fallthru
      _
    // Predicated region
    $region14: #{tpu_custom_call.1} parent=1 // pred_check
      _
    $region15: #{tpu_custom_call.1} parent=1 // pred_check_branch
      %41 = sbr.rel (0) target = $region17
    $region16: #{tpu_custom_call.1} parent=1 // pred_region
      %43 = dma.done [#allocation4], 256
    $region17: #{tpu_custom_call.1} parent=1 // pred_fallthru
      _
    %44 = vsyncpa [#allocation3], 1
    %45 = vsyncpa [#allocation4], 1

</llo_original>
